<compile_context>
chip_gen: v6e
topology: v6e:2x2x1
jax: 0.10.0
libtpu: 0.0.40
codegen_flags: <defaults>
</compile_context>

<pallas_src>
import functools

import jax
import jax.numpy as jnp
from jax.experimental import pallas as pl
from jax.experimental.pallas import tpu as pltpu


_LANE = 128
_SUBLANE = 8
_TILE_M = 256

_CALL_CACHE = {}


def _round_up(x, m):
    return -(-x // m) * m


def _padded_rows(n):
    mp = _round_up(max(n, 1), _SUBLANE)
    if mp > _TILE_M:
        mp = _round_up(mp, _TILE_M)
    return mp


# ------------------------------ in-kernel helpers -----------------------------

def _masked_log_softmax(logits, n_valid):
    """log_softmax over the last dim restricted to the first n_valid columns."""
    ncols = logits.shape[-1]
    if n_valid >= ncols:
        m = jnp.max(logits, axis=-1, keepdims=True)
        lse = m + jnp.log(jnp.sum(jnp.exp(logits - m), axis=-1, keepdims=True))
        return logits - lse
    col = jax.lax.broadcasted_iota(jnp.int32, logits.shape, logits.ndim - 1)
    valid = col < n_valid
    masked = jnp.where(valid, logits, jnp.full_like(logits, -1e30))
    m = jnp.max(masked, axis=-1, keepdims=True)
    e = jnp.where(valid, jnp.exp(masked - m), 0.0)
    lse = m + jnp.log(jnp.sum(e, axis=-1, keepdims=True))
    return jnp.where(valid, logits - lse, 0.0)


def _linear(h, w_ref, b_ref):
    return jnp.dot(h, w_ref[...], preferred_element_type=jnp.float32) + b_ref[...]


# ------------------------------ Pallas kernels --------------------------------

def _classifier_kernel(*refs, n_hidden, num_classes):
    # refs: x, (W,b)*n_hidden, Wc, bc, h_out, logp_out
    x_ref = refs[0]
    idx = 1
    h = x_ref[...]
    for _ in range(n_hidden):
        w_ref, b_ref = refs[idx], refs[idx + 1]
        idx += 2
        h = jnp.maximum(_linear(h, w_ref, b_ref), 0.0)
    wc_ref, bc_ref = refs[idx], refs[idx + 1]
    h_out_ref, logp_ref = refs[idx + 2], refs[idx + 3]
    h_out_ref[...] = h
    logits = _linear(h, wc_ref, bc_ref)
    logp_ref[...] = _masked_log_softmax(logits, num_classes)


def _adversary_kernel(*refs, n_adv, num_classes):
    # refs: h_rev, for each class: (W,b)*n_adv + (Ws,bs); out: [num_classes, tm, Sp]
    h_ref = refs[0]
    out_ref = refs[-1]
    h = h_ref[...]
    idx = 1
    for j in range(num_classes):
        ch = h
        for _ in range(n_adv):
            w_ref, b_ref = refs[idx], refs[idx + 1]
            idx += 2
            ch = jnp.maximum(_linear(ch, w_ref, b_ref), 0.0)
        ws_ref, bs_ref = refs[idx], refs[idx + 1]
        idx += 2
        logits = _linear(ch, ws_ref, bs_ref)
        out_ref[j] = _masked_log_softmax(logits, 1)


# ---------------------------- pallas_call builders -----------------------------

def _make_classifier_call(mp, tm, fp, hidden_shapes, cp, num_classes):
    key = ("cls", mp, tm, fp, hidden_shapes, cp, int(num_classes))
    if key in _CALL_CACHE:
        return _CALL_CACHE[key]
    n_hidden = len(hidden_shapes)
    hp_last = hidden_shapes[-1][1] if n_hidden else fp
    kern = functools.partial(_classifier_kernel, n_hidden=n_hidden,
                             num_classes=int(num_classes))
    in_specs = [pl.BlockSpec((tm, fp), lambda i: (i, 0))]
    for (kp, np_) in hidden_shapes:
        in_specs.append(pl.BlockSpec((kp, np_), lambda i: (0, 0)))
        in_specs.append(pl.BlockSpec((1, np_), lambda i: (0, 0)))
    in_specs.append(pl.BlockSpec((hp_last, cp), lambda i: (0, 0)))
    in_specs.append(pl.BlockSpec((1, cp), lambda i: (0, 0)))
    out_specs = (pl.BlockSpec((tm, hp_last), lambda i: (i, 0)),
                 pl.BlockSpec((tm, cp), lambda i: (i, 0)))
    call = pl.pallas_call(
        kern,
        out_shape=(jax.ShapeDtypeStruct((mp, hp_last), jnp.float32),
                   jax.ShapeDtypeStruct((mp, cp), jnp.float32)),
        grid=(mp // tm,),
        in_specs=in_specs,
        out_specs=out_specs,
        compiler_params=pltpu.CompilerParams(
            dimension_semantics=("parallel",)),
    )
    _CALL_CACHE[key] = call
    return call


def _make_adversary_call(mp, tm, hp_last, adv_shapes, sens_cp, num_classes):
    key = ("adv", mp, tm, hp_last, adv_shapes, sens_cp, int(num_classes))
    if key in _CALL_CACHE:
        return _CALL_CACHE[key]
    n_adv = len(adv_shapes)
    kern = functools.partial(_adversary_kernel, n_adv=n_adv,
                             num_classes=int(num_classes))
    in_specs = [pl.BlockSpec((tm, hp_last), lambda i: (i, 0))]
    for _ in range(num_classes):
        for (kp, np_) in adv_shapes:
            in_specs.append(pl.BlockSpec((kp, np_), lambda i: (0, 0)))
            in_specs.append(pl.BlockSpec((1, np_), lambda i: (0, 0)))
        last_k = adv_shapes[-1][1] if n_adv else hp_last
        in_specs.append(pl.BlockSpec((last_k, sens_cp), lambda i: (0, 0)))
        in_specs.append(pl.BlockSpec((1, sens_cp), lambda i: (0, 0)))
    out_specs = pl.BlockSpec((num_classes, tm, sens_cp), lambda i: (0, i, 0))
    call = pl.pallas_call(
        kern,
        out_shape=jax.ShapeDtypeStruct((num_classes, mp, sens_cp), jnp.float32),
        grid=(mp // tm,),
        in_specs=in_specs,
        out_specs=out_specs,
        compiler_params=pltpu.CompilerParams(
            dimension_semantics=("parallel",)),
    )
    _CALL_CACHE[key] = call
    return call


# ------------------------------- grad reverse ----------------------------------

@jax.custom_vjp
def grad_reverse(x):
    return x


def _gr_fwd(x):
    return x, None


def _gr_bwd(_, g):
    return (-g,)


grad_reverse.defvjp(_gr_fwd, _gr_bwd)


# --------------------------- parameters (PyTorch-like) --------------------------

def _linear_init(key, out_f, in_f):
    k1, k2 = jax.random.split(key)
    bound = 1.0 / (in_f ** 0.5)
    w = jax.random.uniform(k1, (out_f, in_f), jnp.float32, -bound, bound)
    b = jax.random.uniform(k2, (out_f,), jnp.float32, -bound, bound)
    return w, b


def init_cfairnet_params(seed, n_features, num_classes, hidden_layers,
                         adversary_layers):
    base = jax.random.PRNGKey(seed)
    counter = [0]

    def nk():
        counter[0] += 1
        return jax.random.fold_in(base, counter[0])

    num_neurons = [n_features] + list(hidden_layers)
    params = {
        "hiddens": [_linear_init(nk(), num_neurons[i + 1], num_neurons[i])
                    for i in range(len(num_neurons) - 1)],
        "softmax": _linear_init(nk(), num_classes, num_neurons[-1]),
    }
    num_adv = [num_neurons[-1]] + list(adversary_layers)
    params["adversaries"] = [
        [_linear_init(nk(), num_adv[i + 1], num_adv[i])
         for i in range(len(adversary_layers))]
        for _ in range(num_classes)
    ]
    params["sensitive"] = [_linear_init(nk(), 1, num_adv[-1])
                           for _ in range(num_classes)]
    return params


def _pad_gemm_weight(w, b):
    """PyTorch layout w:[out,in], b:[out] -> padded GEMM layout ([Kp,Np],[1,Np])."""
    out_f, in_f = w.shape
    kp = _round_up(in_f, _LANE)
    npad = _round_up(out_f, _LANE)
    wt = jnp.zeros((kp, npad), jnp.float32).at[:in_f, :out_f].set(w.T)
    bp = jnp.zeros((1, npad), jnp.float32).at[0, :out_f].set(b)
    return wt, bp


def prepare_pallas_params(params):
    """Precompute transposed + zero-padded GEMM-layout weights once."""
    return {
        "hiddens": [_pad_gemm_weight(w, b) for (w, b) in params["hiddens"]],
        "softmax": _pad_gemm_weight(*params["softmax"]),
        "adversaries": [[_pad_gemm_weight(w, b) for (w, b) in layer_list]
                        for layer_list in params["adversaries"]],
        "sensitive": [_pad_gemm_weight(w, b) for (w, b) in params["sensitive"]],
    }


# ---------------------------------- forward -------------------------------------

def cfairnet_forward_pallas(prep, inputs, labels, *, num_classes):
    """Returns (logprobs, [(c_logprobs_full, mask), ...]) like CFairNet.forward.

    TODO(synk): c_h_relu = h_relu[labels == j] is dynamic-shape boolean indexing;
    each adversary head is computed on all rows and returned with its mask.
    """
    n, f = inputs.shape
    mp = _padded_rows(n)
    tm = mp if mp <= _TILE_M else _TILE_M
    fp = _round_up(f, _LANE)
    x = jnp.pad(inputs.astype(jnp.float32), ((0, mp - n), (0, fp - f)))

    hiddens = prep["hiddens"]
    sw, sb = prep["softmax"]
    hidden_shapes = tuple(w.shape for (w, _) in hiddens)
    hp_last = hidden_shapes[-1][1] if hiddens else fp
    cp = sw.shape[1]

    # --- Kernel A: hidden chain + classifier head + log_softmax (emits h_relu) ---
    cls_args = [x]
    for (w, b) in hiddens:
        cls_args += [w, b]
    cls_args += [sw, sb]
    cls_call = _make_classifier_call(mp, tm, fp, hidden_shapes, cp, num_classes)
    h_relu_pad, logp_pad = cls_call(*cls_args)
    logprobs = logp_pad[:n, :num_classes]

    # --- grad reverse boundary (identity forward, negation backward) ---
    h_rev = grad_reverse(h_relu_pad)

    # --- Kernel B: all adversary chains + sensitive heads + log_softmax ---
    adv_shapes = tuple(w.shape for (w, _) in prep["adversaries"][0]) \
        if num_classes > 0 else ()
    ws0, _ = prep["sensitive"][0]
    sens_cp = ws0.shape[1]
    adv_args = [h_rev]
    for j in range(num_classes):
        for (w, b) in prep["adversaries"][j]:
            adv_args += [w, b]
        ws, bs = prep["sensitive"][j]
        adv_args += [ws, bs]
    adv_call = _make_adversary_call(mp, tm, hp_last, adv_shapes, sens_cp,
                                    num_classes)
    c_stack = adv_call(*adv_args)  # [num_classes, mp, sens_cp]

    c_losses = []
    for j in range(num_classes):
        mask = (labels.reshape(-1) == j)
        c_losses.append((c_stack[j, :n, :1], mask))
    return logprobs, c_losses


# --------------------------- pure-JAX reference check ----------------------------

def cfairnet_forward_ref(params, inputs, labels, *, num_classes):
    hp = jax.lax.Precision.HIGHEST
    h = inputs.astype(jnp.float32)
    for (w, b) in params["hiddens"]:
        h = jax.nn.relu(jnp.dot(h, w.T, precision=hp) + b)
    sw, sb = params["softmax"]
    logprobs = jax.nn.log_softmax(jnp.dot(h, sw.T, precision=hp) + sb, axis=1)
    c_losses = []
    for j in range(num_classes):
        mask = (labels.reshape(-1) == j)
        ch = h
        for (w, b) in params["adversaries"][j]:
            ch = jax.nn.relu(jnp.dot(ch, w.T, precision=hp) + b)
        cw, cb = params["sensitive"][j]
        c_cls = jax.nn.log_softmax(jnp.dot(ch, cw.T, precision=hp) + cb, axis=1)
        c_losses.append((c_cls, mask))
    return logprobs, c_losses


def _check(prep, params, inputs, labels, num_classes):
    logprobs, c_losses = cfairnet_forward_pallas(
        prep, inputs, labels, num_classes=num_classes)
    jax.block_until_ready((logprobs, c_losses))
    ref_logprobs, ref_c = cfairnet_forward_ref(
        params, inputs, labels, num_classes=num_classes)

    n = inputs.shape[0]
    assert logprobs.shape == (n, num_classes)
    assert bool(jnp.all(jnp.isfinite(logprobs)))
    assert bool(jnp.allclose(jnp.sum(jnp.exp(logprobs), axis=1), 1.0, atol=1e-4))
    assert bool(jnp.allclose(logprobs, ref_logprobs, atol=1e-3, rtol=1e-3))

    assert len(c_losses) == num_classes
    for j in range(num_classes):
        c_cls, mask = c_losses[j]
        rc_cls, rmask = ref_c[j]
        assert c_cls.shape == (n, 1) and mask.shape == (n,)
        assert mask.dtype == jnp.bool_
        assert bool(jnp.all(jnp.isfinite(c_cls)))
        assert bool(jnp.allclose(c_cls, rc_cls, atol=1e-3, rtol=1e-3))
        assert bool(jnp.array_equal(mask, rmask))


# ------------------------------------- main ---------------------------------------

if __name__ == "__main__":
    key = jax.random.PRNGKey(0)
    k_x, k_l, k_x2, k_l2 = jax.random.split(key, 4)

    n_features = 32
    num_classes = 2
    hidden_layers = [60]
    adversary_layers = [50]

    params = init_cfairnet_params(0, n_features, num_classes,
                                  hidden_layers, adversary_layers)
    prep = prepare_pallas_params(params)

    # Config 1: batch multiple of 8.
    batch = 16
    inputs = jax.random.normal(k_x, (batch, n_features), jnp.float32)
    labels = jax.random.randint(k_l, (batch,), 0, num_classes, jnp.int32)
    _check(prep, params, inputs, labels, num_classes)

    # Config 2: batch NOT a multiple of 8 (exercises row padding).
    batch2 = 13
    inputs2 = jax.random.normal(k_x2, (batch2, n_features), jnp.float32)
    labels2 = jax.random.randint(k_l2, (batch2,), 0, num_classes, jnp.int32)
    _check(prep, params, inputs2, labels2, num_classes)

    print("KERNEL_OK")
</pallas_src>

<mosaic_0001>
module attributes {stable_mosaic.version = 11 : i64} {
  func.func @_classifier_kernel(%arg0: i32, %arg1: memref<16x128xf32, #tpu.memory_space<vmem>>, %arg2: memref<128x128xf32, #tpu.memory_space<vmem>>, %arg3: memref<1x128xf32, #tpu.memory_space<vmem>>, %arg4: memref<128x128xf32, #tpu.memory_space<vmem>>, %arg5: memref<1x128xf32, #tpu.memory_space<vmem>>, %arg6: memref<16x128xf32, #tpu.memory_space<vmem>>, %arg7: memref<16x128xf32, #tpu.memory_space<vmem>>) attributes {dimension_semantics = [#tpu.dimension_semantics<parallel>], iteration_bounds = array<i64: 1>, scalar_prefetch = 0 : i64, scratch_operands = 0 : i64, tpu.core_type = #tpu.core_type<tc>, window_params = [{transform_indices = @transform_0, window_bounds = array<i64: 16, 128>}, {pipeline_mode = #tpu.pipeline_mode<synchronous>, transform_indices = @transform_1, window_bounds = array<i64: 128, 128>}, {pipeline_mode = #tpu.pipeline_mode<synchronous>, transform_indices = @transform_2, window_bounds = array<i64: 1, 128>}, {pipeline_mode = #tpu.pipeline_mode<synchronous>, transform_indices = @transform_3, window_bounds = array<i64: 128, 128>}, {pipeline_mode = #tpu.pipeline_mode<synchronous>, transform_indices = @transform_4, window_bounds = array<i64: 1, 128>}, {transform_indices = @transform_5, window_bounds = array<i64: 16, 128>}, {transform_indices = @transform_6, window_bounds = array<i64: 16, 128>}]} {
    %c0 = arith.constant 0 : index
    %c0_0 = arith.constant 0 : index
    %0 = vector.load %arg1[%c0, %c0_0] : memref<16x128xf32, #tpu.memory_space<vmem>>, vector<16x128xf32>
    %c0_1 = arith.constant 0 : index
    %c0_2 = arith.constant 0 : index
    %1 = vector.load %arg2[%c0_1, %c0_2] : memref<128x128xf32, #tpu.memory_space<vmem>>, vector<128x128xf32>
    %cst = arith.constant dense<0.000000e+00> : vector<16x128xf32>
    %2 = tpu.matmul %0, %1, %cst {dimension_numbers = #tpu.dot_dimension_numbers<[1], [0], [0], [1], [0, 0, 1, 1], [], []>} : vector<16x128xf32>, vector<128x128xf32>, vector<16x128xf32> -> vector<16x128xf32>
    %c0_3 = arith.constant 0 : index
    %c0_4 = arith.constant 0 : index
    %3 = vector.load %arg3[%c0_3, %c0_4] : memref<1x128xf32, #tpu.memory_space<vmem>>, vector<1x128xf32>
    %4 = vector.broadcast %3 : vector<1x128xf32> to vector<16x128xf32>
    %5 = arith.addf %2, %4 : vector<16x128xf32>
    %cst_5 = arith.constant 0.000000e+00 : f32
    %6 = vector.broadcast %cst_5 : f32 to vector<16x128xf32>
    %7 = arith.maximumf %5, %6 : vector<16x128xf32>
    %c0_6 = arith.constant 0 : index
    %c0_7 = arith.constant 0 : index
    %8 = vector.load %arg6[%c0_6, %c0_7] : memref<16x128xf32, #tpu.memory_space<vmem>>, vector<16x128xf32>
    tpu.vector_store %arg6[%c0_6, %c0_7], %7 {strides = array<i32>} : memref<16x128xf32, #tpu.memory_space<vmem>>, vector<16x128xf32>,
    %c0_8 = arith.constant 0 : index
    %c0_9 = arith.constant 0 : index
    %9 = vector.load %arg4[%c0_8, %c0_9] : memref<128x128xf32, #tpu.memory_space<vmem>>, vector<128x128xf32>
    %cst_10 = arith.constant dense<0.000000e+00> : vector<16x128xf32>
    %10 = tpu.matmul %7, %9, %cst_10 {dimension_numbers = #tpu.dot_dimension_numbers<[1], [0], [0], [1], [0, 0, 1, 1], [], []>} : vector<16x128xf32>, vector<128x128xf32>, vector<16x128xf32> -> vector<16x128xf32>
    %c0_11 = arith.constant 0 : index
    %c0_12 = arith.constant 0 : index
    %11 = vector.load %arg5[%c0_11, %c0_12] : memref<1x128xf32, #tpu.memory_space<vmem>>, vector<1x128xf32>
    %12 = vector.broadcast %11 : vector<1x128xf32> to vector<16x128xf32>
    %13 = arith.addf %10, %12 : vector<16x128xf32>
    %14 = tpu.iota {dimensions = array<i32: 1>} : vector<16x128xi32>
    %c2_i32 = arith.constant 2 : i32
    %15 = vector.broadcast %c2_i32 : i32 to vector<16x128xi32>
    %16 = arith.cmpi slt, %14, %15 : vector<16x128xi32>
    %cst_13 = arith.constant -1.000000e+30 : f32
    %17 = vector.broadcast %cst_13 : f32 to vector<16x128xf32>
    %18 = arith.select %16, %13, %17 : vector<16x128xi1>, vector<16x128xf32>
    %cst_14 = arith.constant dense<0xFF800000> : vector<16xf32>
    %19 = vector.multi_reduction <maximumf>, %18, %cst_14 [1] : vector<16x128xf32> to vector<16xf32>
    %20 = vector.shape_cast %19 : vector<16xf32> to vector<16x1xf32>
    %21 = vector.broadcast %20 : vector<16x1xf32> to vector<16x128xf32>
    %22 = arith.subf %18, %21 : vector<16x128xf32>
    %23 = math.exp %22 : vector<16x128xf32>
    %cst_15 = arith.constant 0.000000e+00 : f32
    %24 = vector.broadcast %cst_15 : f32 to vector<16x128xf32>
    %25 = arith.select %16, %23, %24 : vector<16x128xi1>, vector<16x128xf32>
    %cst_16 = arith.constant dense<0.000000e+00> : vector<16xf32>
    %26 = vector.multi_reduction <add>, %25, %cst_16 [1] : vector<16x128xf32> to vector<16xf32>
    %27 = vector.shape_cast %26 : vector<16xf32> to vector<16x1xf32>
    %28 = math.log %27 : vector<16x1xf32>
    %29 = arith.addf %20, %28 : vector<16x1xf32>
    %30 = vector.broadcast %29 : vector<16x1xf32> to vector<16x128xf32>
    %31 = arith.subf %13, %30 : vector<16x128xf32>
    %cst_17 = arith.constant 0.000000e+00 : f32
    %32 = vector.broadcast %cst_17 : f32 to vector<16x128xf32>
    %33 = arith.select %16, %31, %32 : vector<16x128xi1>, vector<16x128xf32>
    %c0_18 = arith.constant 0 : index
    %c0_19 = arith.constant 0 : index
    %34 = vector.load %arg7[%c0_18, %c0_19] : memref<16x128xf32, #tpu.memory_space<vmem>>, vector<16x128xf32>
    tpu.vector_store %arg7[%c0_18, %c0_19], %33 {strides = array<i32>} : memref<16x128xf32, #tpu.memory_space<vmem>>, vector<16x128xf32>,
    return
  }
  func.func @transform_0(%arg0: i32) -> (i32, i32) {
    %c0_i32 = arith.constant 0 : i32
    %c0_i32_0 = arith.constant 0 : i32
    return %arg0, %c0_i32 : i32, i32
  }
  func.func @transform_1(%arg0: i32) -> (i32, i32) {
    %c0_i32 = arith.constant 0 : i32
    %c0_i32_0 = arith.constant 0 : i32
    %c0_i32_1 = arith.constant 0 : i32
    return %c0_i32, %c0_i32_0 : i32, i32
  }
  func.func @transform_2(%arg0: i32) -> (i32, i32) {
    %c0_i32 = arith.constant 0 : i32
    %c0_i32_0 = arith.constant 0 : i32
    %c0_i32_1 = arith.constant 0 : i32
    return %c0_i32, %c0_i32_0 : i32, i32
  }
  func.func @transform_3(%arg0: i32) -> (i32, i32) {
    %c0_i32 = arith.constant 0 : i32
    %c0_i32_0 = arith.constant 0 : i32
    %c0_i32_1 = arith.constant 0 : i32
    return %c0_i32, %c0_i32_0 : i32, i32
  }
  func.func @transform_4(%arg0: i32) -> (i32, i32) {
    %c0_i32 = arith.constant 0 : i32
    %c0_i32_0 = arith.constant 0 : i32
    %c0_i32_1 = arith.constant 0 : i32
    return %c0_i32, %c0_i32_0 : i32, i32
  }
  func.func @transform_5(%arg0: i32) -> (i32, i32) {
    %c0_i32 = arith.constant 0 : i32
    %c0_i32_0 = arith.constant 0 : i32
    return %arg0, %c0_i32 : i32, i32
  }
  func.func @transform_6(%arg0: i32) -> (i32, i32) {
    %c0_i32 = arith.constant 0 : i32
    %c0_i32_0 = arith.constant 0 : i32
    return %arg0, %c0_i32 : i32, i32
  }
}

</mosaic_0001>

<llo_original>
// kernel: tpu_custom_call.1
$region0: #{tpu_custom_call.1}
  #allocation0 [shape = 'u32[]', space=smem, size = 0x4, offset = 0x4, fixed_abs, tag = 'smem constant byte address 0x4 - core index']
  #allocation1 [shape = 'u32[144,128]{1,0:T(1,128)}', space=vmem, size = 0x12000, scoped, tag = 'internal scratch']
  %s0 = inlined_call_operand.hbm [shape: f32[16,128], index: 0, kind: input, shape index: {}]
  %s1 = inlined_call_operand.hbm [shape: f32[128,128], index: 1, kind: input, shape index: {}]
  %s2 = inlined_call_operand.vmem [shape: f32[1,128], index: 2, kind: input, shape index: {}]
  %s3 = inlined_call_operand.hbm [shape: f32[128,128], index: 3, kind: input, shape index: {}]
  %s4 = inlined_call_operand.vmem [shape: f32[1,128], index: 4, kind: input, shape index: {}]
  %s5 = inlined_call_operand.hbm [shape: f32[16,128], index: 5, kind: output, shape index: {0}]
  %s6 = inlined_call_operand.hbm [shape: f32[16,128], index: 6, kind: output, shape index: {1}]
  %7 = xla_tuple %s5, %s6
  %s8 = sld [smem:[#allocation0]]
  $region50: #{tpu_custom_call.1} parent=0
    _
  %s10 = ssub.s32 1, %s8
  %s11 = scalar_select 0, %s10, %s8
  $region1: #{tpu_custom_call.1} parent=0
    #allocation2 [shape = 'u8[8192]{0}', space=vmem, size = 0x2000, scoped, tag = 'input window, operand 0, single buffered']
    #allocation3 [shape = 's32[1]{0}', space=sflag, size = 0x4, scoped, tag = 'scoped memory for tpu_custom_call.1']
    #allocation4 [shape = 's32[1]{0}', space=sflag, size = 0x4, scoped, tag = 'scoped memory for tpu_custom_call.1']
    #allocation5 [shape = 'u8[65536]{0}', space=vmem, size = 0x10000, scoped, tag = 'input window, operand 1, single buffered']
    #allocation6 [shape = 's32[1]{0}', space=sflag, size = 0x4, scoped, tag = 'scoped memory for tpu_custom_call.1']
    #allocation7 [shape = 'u8[65536]{0}', space=vmem, size = 0x10000, scoped, tag = 'input window, operand 3, single buffered']
    #allocation8 [shape = 'u8[8192]{0}', space=vmem, size = 0x2000, scoped, tag = 'output window, operand 0, single buffered']
    #allocation9 [shape = 'u8[8192]{0}', space=vmem, size = 0x2000, scoped, tag = 'output window, operand 1, single buffered']
    #allocation10 [shape = 's32[1]{0}', space=sflag, size = 0x4, scoped, tag = 'scoped memory for tpu_custom_call.1']
    %12 = vsyncpa [#allocation3], 0
    %13 = vsyncpa [#allocation6], 0
    %14 = vsyncpa [#allocation4], 0
    %15 = vsyncpa [#allocation10], 0
    // Predicated region
    $region2: #{tpu_custom_call.1} parent=1 // pred_check
      _
    $region3: #{tpu_custom_call.1} parent=1 // pred_check_branch
      %17 = sbr.rel (0) target = $region5
    $region4: #{tpu_custom_call.1} parent=1 // pred_region
      %s19 = ssub.s32 256, 256
      %20 = vsyncadd [#allocation3], %s19
      %s21 = sshll.u32 [#allocation2], 4
      %s22 = int_to_ptr.vmem [resolvable:$true] %s21
      %27 = dma.hbm_to_vmem [thread:$0]  %s0, 256, %s22, [#allocation3], 128, 128, 8
    $region5: #{tpu_custom_call.1} parent=1 // pred_fallthru
      _
    // Predicated region
    $region6: #{tpu_custom_call.1} parent=1 // pred_check
      _
    $region7: #{tpu_custom_call.1} parent=1 // pred_check_branch
      %29 = sbr.rel (0) target = $region9
    $region8: #{tpu_custom_call.1} parent=1 // pred_region
      %s31 = ssub.s32 2048, 2048
      %32 = vsyncadd [#allocation6], %s31
      %s33 = sshll.u32 [#allocation5], 4
      %s34 = int_to_ptr.vmem [resolvable:$true] %s33
      %39 = dma.hbm_to_vmem [thread:$0]  %s1, 2048, %s34, [#allocation6], 128, 128, 8
    $region9: #{tpu_custom_call.1} parent=1 // pred_fallthru
      _
    // Predicated region
    $region10: #{tpu_custom_call.1} parent=1 // pred_check
      _
    $region11: #{tpu_custom_call.1} parent=1 // pred_check_branch
      %41 = sbr.rel (0) target = $region13
    $region12: #{tpu_custom_call.1} parent=1 // pred_region
      _
    $region13: #{tpu_custom_call.1} parent=1 // pred_fallthru
      _
    // Predicated region
    $region14: #{tpu_custom_call.1} parent=1 // pred_check
      _
    $region15: #{tpu_custom_call.1} parent=1 // pred_check_branch
      %43 = sbr.rel (0) target = $region17
    $region16: #{tpu_custom_call.1} parent=1 // pred_region
      %s45 = ssub.s32 2048, 2048
      %46 = vsyncadd [#allocation6], %s45
      %s47 = sshll.u32 [#allocation7], 4
      %s48 = int_to_ptr.vmem [resolvable:$true] %s47
      %53 = dma.hbm_to_vmem [thread:$0]  %s3, 2048, %s48, [#allocation6], 128, 128, 8
    $region17: #{tpu_custom_call.1} parent=1 // pred_fallthru
      _
    // Predicated region
    $region18: #{tpu_custom_call.1} parent=1 // pred_check
      _
    $region19: #{tpu_custom_call.1} parent=1 // pred_check_branch
      %55 = sbr.rel (0) target = $region21
    $region20: #{tpu_custom_call.1} parent=1 // pred_region
      _
    $region21: #{tpu_custom_call.1} parent=1 // pred_fallthru
      _
    // Predicated region
    $region22: #{tpu_custom_call.1} parent=1 // pred_check
      _
    $region23: #{tpu_custom_call.1} parent=1 // pred_check_branch
      %57 = sbr.rel (0) target = $region25
    $region24: #{tpu_custom_call.1} parent=1 // pred_region
      %58 = dma.done [#allocation3], 256
    $region25: #{tpu_custom_call.1} parent=1 // pred_fallthru
      _
    // Predicated region
    $region26: #{tpu_custom_call.1} parent=1 // pred_check
      _
    $region27: #{tpu_custom_call.1} parent=1 // pred_check_branch
      %60 = sbr.rel (0) target = $region29
    $region28: #{tpu_custom_call.1} parent=1 // pred_region
      %61 = dma.done [#allocation6], 2048
    $region29: #{tpu_custom_call.1} parent=1 // pred_fallthru
      _
    // Predicated region
    $region30: #{tpu_custom_call.1} parent=1 // pred_check
      _
    $region31: #{tpu_custom_call.1} parent=1 // pred_check_branch
      %63 = sbr.rel (0) target = $region33
    $region32: #{tpu_custom_call.1} parent=1 // pred_region
      %64 = dma.done [#allocation6], 2048
    $region33: #{tpu_custom_call.1} parent=1 // pred_fallthru
      _
    %v65 = vld [vmem:[#allocation2] sm:$0xff]
    %v66 = vld [vmem:[#allocation2 + $0x8] sm:$0xff]
    %v67 = vld [vmem:[#allocation5] sm:$0xff]
    %v68 = vld [vmem:[#allocation5 + $0x8] sm:$0xff]
    %v69 = vld [vmem:[#allocation5 + $0x10] sm:$0xff]
    %v70 = vld [vmem:[#allocation5 + $0x18] sm:$0xff]
    %v71 = vld [vmem:[#allocation5 + $0x20] sm:$0xff]
    %v72 = vld [vmem:[#allocation5 + $0x28] sm:$0xff]
    %v73 = vld [vmem:[#allocation5 + $0x30] sm:$0xff]
    %v74 = vld [vmem:[#allocation5 + $0x38] sm:$0xff]
    %v75 = vld [vmem:[#allocation5 + $0x40] sm:$0xff]
    %v76 = vld [vmem:[#allocation5 + $0x48] sm:$0xff]
    %v77 = vld [vmem:[#allocation5 + $0x50] sm:$0xff]
    %v78 = vld [vmem:[#allocation5 + $0x58] sm:$0xff]
    %v79 = vld [vmem:[#allocation5 + $0x60] sm:$0xff]
    %v80 = vld [vmem:[#allocation5 + $0x68] sm:$0xff]
    %v81 = vld [vmem:[#allocation5 + $0x70] sm:$0xff]
    %v82 = vld [vmem:[#allocation5 + $0x78] sm:$0xff]
    %v83 = vld [vmem:[%s2] sm:$0x1]
    %v85 = vlaneseq
    %v86 = vshrl.u32 %v85, 7
    %v87 = vsub.s32 0, %v86
    %v88 = vrot.slane %v83, %v87
    %90 = vmatprep.subr.mxu0 0.0
    %91 = vmatpush1.msra.mxu0 %v82
    %92 = vmatprep.subr.mxu0 0.0
    %93 = vmatpush1.msra.mxu0 %v81
    %94 = vmatprep.subr.mxu0 0.0
    %95 = vmatpush1.msra.mxu0 %v80
    %96 = vmatprep.subr.mxu0 0.0
    %97 = vmatpush1.msra.mxu0 %v79
    %98 = vmatprep.subr.mxu0 0.0
    %99 = vmatpush1.msra.mxu0 %v78
    %100 = vmatprep.subr.mxu0 0.0
    %101 = vmatpush1.msra.mxu0 %v77
    %102 = vmatprep.subr.mxu0 0.0
    %103 = vmatpush1.msra.mxu0 %v76
    %104 = vmatprep.subr.mxu0 0.0
    %105 = vmatpush1.msra.mxu0 %v75
    %106 = vmatprep.subr.mxu0 0.0
    %107 = vmatpush1.msra.mxu0 %v74
    %108 = vmatprep.subr.mxu0 0.0
    %109 = vmatpush1.msra.mxu0 %v73
    %110 = vmatprep.subr.mxu0 0.0
    %111 = vmatpush1.msra.mxu0 %v72
    %112 = vmatprep.subr.mxu0 0.0
    %113 = vmatpush1.msra.mxu0 %v71
    %114 = vmatprep.subr.mxu0 0.0
    %115 = vmatpush1.msra.mxu0 %v70
    %116 = vmatprep.subr.mxu0 0.0
    %117 = vmatpush1.msra.mxu0 %v69
    %118 = vmatprep.subr.mxu0 0.0
    %119 = vmatpush1.msra.mxu0 %v68
    %120 = vmatprep.subr.mxu0 0.0
    %121 = vmatpush1.msra.mxu0 %v67
    %122 = vmatprep.subr.mxu0 0.0
    %123 = vmatpush2.msra.mxu0 0.0
    %124 = vmatprep.subr.mxu0 0.0
    %125 = vmatpush2.msra.mxu0 0.0
    %126 = vmatprep.subr.mxu0 0.0
    %127 = vmatpush2.msra.mxu0 0.0
    %128 = vmatprep.subr.mxu0 0.0
    %129 = vmatpush2.msra.mxu0 0.0
    %130 = vmatprep.subr.mxu0 0.0
    %131 = vmatpush2.msra.mxu0 0.0
    %132 = vmatprep.subr.mxu0 0.0
    %133 = vmatpush2.msra.mxu0 0.0
    %134 = vmatprep.subr.mxu0 0.0
    %135 = vmatpush2.msra.mxu0 0.0
    %136 = vmatprep.subr.mxu0 0.0
    %137 = vmatpush2.msra.mxu0 0.0
    %138 = vmatprep.subr.mxu0 0.0
    %139 = vmatpush2.msra.mxu0 0.0
    %140 = vmatprep.subr.mxu0 0.0
    %141 = vmatpush2.msra.mxu0 0.0
    %142 = vmatprep.subr.mxu0 0.0
    %143 = vmatpush2.msra.mxu0 0.0
    %144 = vmatprep.subr.mxu0 0.0
    %145 = vmatpush2.msra.mxu0 0.0
    %146 = vmatprep.subr.mxu0 0.0
    %147 = vmatpush2.msra.mxu0 0.0
    %148 = vmatprep.subr.mxu0 0.0
    %149 = vmatpush2.msra.mxu0 0.0
    %150 = vmatprep.subr.mxu0 0.0
    %151 = vmatpush2.msra.mxu0 0.0
    %152 = vmatprep.subr.mxu0 0.0
    %153 = vmatpush2.msra.mxu0 0.0
    %154 = vmatprep.mubr.f32.mxu0 0.0
    %155 = vmatmul.mubr.f32.gmra.mxu0 %v65
    %v156 = vpop.f32.mrf.mxu0
    %v157 = vadd.f32 %v88, %v156
    %v158 = vpop.f32.mrf.mxu0
    %159 = vmatprep.mubr.f32.mxu0 0.0
    %160 = vmatmul.mubr.f32.gmra.mxu0 %v66
    %v161 = vpop.f32.mrf.mxu0
    %v162 = vadd.f32 %v88, %v161
    %v163 = vpop.f32.mrf.mxu0
    %164 = vdwg.mxu0
    %v165 = vmax.f32 %v157, 0.0
    %v166 = vmax.f32 %v162, 0.0
    %167 = vst [vmem:[#allocation8] sm:$0xff] %v165
    %168 = vst [vmem:[#allocation8 + $0x8] sm:$0xff] %v166
    %v169 = vld [vmem:[#allocation7] sm:$0xff]
    %v170 = vld [vmem:[#allocation7 + $0x8] sm:$0xff]
    %v171 = vld [vmem:[#allocation7 + $0x10] sm:$0xff]
    %v172 = vld [vmem:[#allocation7 + $0x18] sm:$0xff]
    %v173 = vld [vmem:[#allocation7 + $0x20] sm:$0xff]
    %v174 = vld [vmem:[#allocation7 + $0x28] sm:$0xff]
    %v175 = vld [vmem:[#allocation7 + $0x30] sm:$0xff]
    %v176 = vld [vmem:[#allocation7 + $0x38] sm:$0xff]
    %v177 = vld [vmem:[#allocation7 + $0x40] sm:$0xff]
    %v178 = vld [vmem:[#allocation7 + $0x48] sm:$0xff]
    %v179 = vld [vmem:[#allocation7 + $0x50] sm:$0xff]
    %v180 = vld [vmem:[#allocation7 + $0x58] sm:$0xff]
    %v181 = vld [vmem:[#allocation7 + $0x60] sm:$0xff]
    %v182 = vld [vmem:[#allocation7 + $0x68] sm:$0xff]
    %v183 = vld [vmem:[#allocation7 + $0x70] sm:$0xff]
    %v184 = vld [vmem:[#allocation7 + $0x78] sm:$0xff]
    %v185 = vld [vmem:[%s4] sm:$0x1]
    %v187 = vlaneseq
    %v188 = vshrl.u32 %v187, 7
    %v189 = vsub.s32 0, %v188
    %v190 = vrot.slane %v185, %v189
    %192 = vmatprep.subr.mxu0 0.0
    %193 = vmatpush1.msra.mxu0 %v184
    %194 = vmatprep.subr.mxu0 0.0
    %195 = vmatpush1.msra.mxu0 %v183
    %196 = vmatprep.subr.mxu0 0.0
    %197 = vmatpush1.msra.mxu0 %v182
    %198 = vmatprep.subr.mxu0 0.0
    %199 = vmatpush1.msra.mxu0 %v181
    %200 = vmatprep.subr.mxu0 0.0
    %201 = vmatpush1.msra.mxu0 %v180
    %202 = vmatprep.subr.mxu0 0.0
    %203 = vmatpush1.msra.mxu0 %v179
    %204 = vmatprep.subr.mxu0 0.0
    %205 = vmatpush1.msra.mxu0 %v178
    %206 = vmatprep.subr.mxu0 0.0
    %207 = vmatpush1.msra.mxu0 %v177
    %208 = vmatprep.subr.mxu0 0.0
    %209 = vmatpush1.msra.mxu0 %v176
    %210 = vmatprep.subr.mxu0 0.0
    %211 = vmatpush1.msra.mxu0 %v175
    %212 = vmatprep.subr.mxu0 0.0
    %213 = vmatpush1.msra.mxu0 %v174
    %214 = vmatprep.subr.mxu0 0.0
    %215 = vmatpush1.msra.mxu0 %v173
    %216 = vmatprep.subr.mxu0 0.0
    %217 = vmatpush1.msra.mxu0 %v172
    %218 = vmatprep.subr.mxu0 0.0
    %219 = vmatpush1.msra.mxu0 %v171
    %220 = vmatprep.subr.mxu0 0.0
    %221 = vmatpush1.msra.mxu0 %v170
    %222 = vmatprep.subr.mxu0 0.0
    %223 = vmatpush1.msra.mxu0 %v169
    %224 = vmatprep.subr.mxu0 0.0
    %225 = vmatpush2.msra.mxu0 0.0
    %226 = vmatprep.subr.mxu0 0.0
    %227 = vmatpush2.msra.mxu0 0.0
    %228 = vmatprep.subr.mxu0 0.0
    %229 = vmatpush2.msra.mxu0 0.0
    %230 = vmatprep.subr.mxu0 0.0
    %231 = vmatpush2.msra.mxu0 0.0
    %232 = vmatprep.subr.mxu0 0.0
    %233 = vmatpush2.msra.mxu0 0.0
    %234 = vmatprep.subr.mxu0 0.0
    %235 = vmatpush2.msra.mxu0 0.0
    %236 = vmatprep.subr.mxu0 0.0
    %237 = vmatpush2.msra.mxu0 0.0
    %238 = vmatprep.subr.mxu0 0.0
    %239 = vmatpush2.msra.mxu0 0.0
    %240 = vmatprep.subr.mxu0 0.0
    %241 = vmatpush2.msra.mxu0 0.0
    %242 = vmatprep.subr.mxu0 0.0
    %243 = vmatpush2.msra.mxu0 0.0
    %244 = vmatprep.subr.mxu0 0.0
    %245 = vmatpush2.msra.mxu0 0.0
    %246 = vmatprep.subr.mxu0 0.0
    %247 = vmatpush2.msra.mxu0 0.0
    %248 = vmatprep.subr.mxu0 0.0
    %249 = vmatpush2.msra.mxu0 0.0
    %250 = vmatprep.subr.mxu0 0.0
    %251 = vmatpush2.msra.mxu0 0.0
    %252 = vmatprep.subr.mxu0 0.0
    %253 = vmatpush2.msra.mxu0 0.0
    %254 = vmatprep.subr.mxu0 0.0
    %255 = vmatpush2.msra.mxu0 0.0
    %256 = vmatprep.mubr.f32.mxu0 0.0
    %257 = vmatmul.mubr.f32.gmra.mxu0 %v165
    %v258 = vpop.f32.mrf.mxu0
    %v259 = vadd.f32 %v190, %v258
    %v260 = vpop.f32.mrf.mxu0
    %261 = vmatprep.mubr.f32.mxu0 0.0
    %262 = vmatmul.mubr.f32.gmra.mxu0 %v166
    %v263 = vpop.f32.mrf.mxu0
    %v264 = vadd.f32 %v190, %v263
    %v265 = vpop.f32.mrf.mxu0
    %266 = vdwg.mxu0
    %v267 = vlaneseq
    %v268 = vand.u32 %v267, 127
    %vm269 = vcmp.lt.s32.totalorder %v268, 2
    %v270 = vsel %vm269, %v259, -1e+30
    %v271 = vsel %vm269, %v264, -1e+30
    %272 = vmax.xlane.f32.xlu0 %v270
    %v273 = vpop.xlane.xlu0 %272
    %274 = vmax.xlane.f32.xlu0 %v271
    %v275 = vpop.xlane.xlu0 %274
    %v276 = vsub.f32 %v270, %v273
    %v277 = vsub.f32 %v271, %v275
    %v278 = vmul.f32 %v276, 1.442695
    %v279 = vpow.pop %v278
    %v280 = vmul.f32 %v277, 1.442695
    %v281 = vpow.pop %v280
    %v282 = vsel %vm269, %v279, 0.0
    %v283 = vsel %vm269, %v281, 0.0
    %284 = vadd.xlane.f32.xlu0 %v282
    %v285 = vpop.xlane.xlu0 %284
    %286 = vadd.xlane.f32.xlu0 %v283
    %v287 = vpop.xlane.xlu0 %286
    %v288 = vlog2.pop %v285
    %v289 = vmul.f32 %v288, 0.6931472
    %v290 = vlog2.pop %v287
    %v291 = vmul.f32 %v290, 0.6931472
    %v292 = vadd.f32 %v273, %v289
    %v293 = vadd.f32 %v275, %v291
    %v294 = vsub.f32 %v259, %v292
    %v295 = vsub.f32 %v264, %v293
    %v296 = vsel %vm269, %v294, 0.0
    %v297 = vsel %vm269, %v295, 0.0
    %298 = vst [vmem:[#allocation9] sm:$0xff] %v296
    %299 = vst [vmem:[#allocation9 + $0x8] sm:$0xff] %v297
    // Predicated region
    $region34: #{tpu_custom_call.1} parent=1 // pred_check
      _
    $region35: #{tpu_custom_call.1} parent=1 // pred_check_branch
      %301 = sbr.rel (0) target = $region37
    $region36: #{tpu_custom_call.1} parent=1 // pred_region
      %s303 = ssub.s32 256, 256
      %304 = vsyncadd [#allocation4], %s303
      %s305 = sshll.u32 [#allocation8], 4
      %s306 = int_to_ptr.vmem [resolvable:$true] %s305
      %311 = dma.vmem_to_hbm [thread:$0]  %s306, 256, %s5, [#allocation4], 128, 128, 8
    $region37: #{tpu_custom_call.1} parent=1 // pred_fallthru
      _
    // Predicated region
    $region38: #{tpu_custom_call.1} parent=1 // pred_check
      _
    $region39: #{tpu_custom_call.1} parent=1 // pred_check_branch
      %313 = sbr.rel (0) target = $region41
    $region40: #{tpu_custom_call.1} parent=1 // pred_region
      %s315 = ssub.s32 256, 256
      %316 = vsyncadd [#allocation10], %s315
      %s317 = sshll.u32 [#allocation9], 4
      %s318 = int_to_ptr.vmem [resolvable:$true] %s317
      %323 = dma.vmem_to_hbm [thread:$0]  %s318, 256, %s6, [#allocation10], 128, 128, 8
    $region41: #{tpu_custom_call.1} parent=1 // pred_fallthru
      _
    // Predicated region
    $region42: #{tpu_custom_call.1} parent=1 // pred_check
      _
    $region43: #{tpu_custom_call.1} parent=1 // pred_check_branch
      %325 = sbr.rel (0) target = $region45
    $region44: #{tpu_custom_call.1} parent=1 // pred_region
      %326 = dma.done [#allocation4], 256
    $region45: #{tpu_custom_call.1} parent=1 // pred_fallthru
      _
    // Predicated region
    $region46: #{tpu_custom_call.1} parent=1 // pred_check
      _
    $region47: #{tpu_custom_call.1} parent=1 // pred_check_branch
      %328 = sbr.rel (0) target = $region49
    $region48: #{tpu_custom_call.1} parent=1 // pred_region
      %329 = dma.done [#allocation10], 256
    $region49: #{tpu_custom_call.1} parent=1 // pred_fallthru
      _
    %330 = vsyncpa [#allocation3], 1
    %331 = vsyncpa [#allocation6], 1
    %332 = vsyncpa [#allocation4], 1
    %333 = vsyncpa [#allocation10], 1

</llo_original>
